<compile_context>
chip_gen: v7x
topology: tpu7x:2x2x1
jax: 0.10.0
libtpu: 0.0.40
codegen_flags: <defaults>
</compile_context>

<pallas_src>
import functools

import jax
import jax.numpy as jnp
from jax.experimental import pallas as pl
from jax.experimental.pallas import tpu as pltpu


def _round_up(x, m):
    return ((x + m - 1) // m) * m


# ----------------------------------------------------------------------------
# Pallas kernel: im2col tile in VMEM + ONE MXU dot + folded-BN shift + ReLU
# ----------------------------------------------------------------------------
def _make_kernel(taps, tm_pos, apply_relu):
    """taps: static lane offsets of the kh*kw conv taps (position axis)."""

    def kernel(x_ref, h_ref, w_ref, shift_ref, o_ref):
        # x_ref:     (cinp, tm_pos)       bf16 main position block (lane-dense)
        # h_ref:     (cinp, halo)         bf16 halo positions right after it
        # w_ref:     (coutp, kh*kw*cinp)  bf16 weights with BN scale folded in
        # shift_ref: (coutp, 1)           f32 folded BN shift (+ conv bias)
        # o_ref:     (coutp, tm_pos)      bf16 output block (lane-dense)
        x = jnp.concatenate([x_ref[...], h_ref[...]], axis=1)
        # im2col tile: each tap is a static lane-offset slice; stack along the
        # (small, sublane-aligned) channel axis so a single dot covers all taps.
        patches = jnp.concatenate([x[:, d:d + tm_pos] for d in taps], axis=0)
        acc = jnp.dot(w_ref[...], patches, preferred_element_type=jnp.float32)
        y = acc + shift_ref[...]
        if apply_relu:
            y = jnp.maximum(y, 0.0)
        o_ref[...] = y.astype(o_ref.dtype)

    return kernel


def _fused_conv_bn_relu(x_planar, w_mat, shift_p, *, taps, cinp, tm_pos, halo,
                        nblk, coutp, apply_relu):
    kdim = w_mat.shape[1]
    assert tm_pos % halo == 0, "halo BlockSpec trick requires halo | tm_pos"
    bpt = tm_pos // halo  # halo-sized blocks per main block
    kernel = _make_kernel(taps, tm_pos, apply_relu)

    # VMEM budget: pipelined blocks + resident weights + in-kernel scratch
    # (im2col tile, f32 dot result, concat temp).  Capped at 48 MiB so the
    # 64 MiB/TC v7x keeps compiler headroom.
    est = (2 * cinp * (tm_pos + halo) * 2      # bf16 input + halo blocks
           + 2 * coutp * kdim * 2              # bf16 weights
           + 2 * coutp * 4                     # f32 shift
           + 2 * coutp * tm_pos * 2            # bf16 output blocks
           + kdim * tm_pos * 2                 # im2col tile scratch
           + coutp * tm_pos * 4                # f32 dot result
           + cinp * (tm_pos + halo) * 2)       # concat temp
    vmem_limit = int(min(48 * 2**20, max(8 * 2**20, 2 * est)))

    return pl.pallas_call(
        kernel,
        out_shape=jax.ShapeDtypeStruct((coutp, nblk * tm_pos), jnp.bfloat16),
        grid_spec=pltpu.PrefetchScalarGridSpec(
            num_scalar_prefetch=0,
            grid=(nblk,),
            in_specs=[
                # main position block
                pl.BlockSpec((cinp, tm_pos), lambda i: (0, i)),
                # halo positions directly after the block: element offset
                # (i+1)*tm_pos, expressed in halo-sized block units
                pl.BlockSpec((cinp, halo), lambda i: (0, (i + 1) * bpt)),
                # grid-invariant folded weights and shift (DMA'd once)
                pl.BlockSpec((coutp, kdim), lambda i: (0, 0)),
                pl.BlockSpec((coutp, 1), lambda i: (0, 0)),
            ],
            out_specs=pl.BlockSpec((coutp, tm_pos), lambda i: (0, i)),
        ),
        compiler_params=pltpu.CompilerParams(
            dimension_semantics=("parallel",),
            vmem_limit_bytes=vmem_limit,
        ),
    )(x_planar, x_planar, w_mat, shift_p)


# ----------------------------------------------------------------------------
# Wrapper: BN folding + layout plumbing (no HBM im2col)
# ----------------------------------------------------------------------------
def basic_conv_forward(x_nchw, params, *, stride=1, padding=0, dilation=1,
                       relu=True, bn=True, eps=1e-5, tm=2048):
    """BasicConv forward: Conv2d(groups=1) -> BatchNorm2d (eval) -> ReLU."""
    w = params["conv_weight"].astype(jnp.float32)          # (Cout, Cin, kh, kw)
    Cout, Cin, kh, kw = w.shape
    N, cx, H, W = x_nchw.shape
    assert cx == Cin, "groups != 1 not supported"
    Hp, Wp = H + 2 * padding, W + 2 * padding
    Ho = (H + 2 * padding - dilation * (kh - 1) - 1) // stride + 1
    Wo = (W + 2 * padding - dilation * (kw - 1) - 1) // stride + 1

    # ---- fold BN (inference) and optional conv bias into scale / shift
    bias = params.get("conv_bias", None)
    b0 = (bias.astype(jnp.float32) if bias is not None
          else jnp.zeros((Cout,), jnp.float32))
    if bn:
        scale = params["bn_gamma"].astype(jnp.float32) * jax.lax.rsqrt(
            params["bn_running_var"].astype(jnp.float32) + eps)
        shift = (b0 - params["bn_running_mean"].astype(jnp.float32)) * scale \
            + params["bn_beta"].astype(jnp.float32)
    else:
        scale = jnp.ones((Cout,), jnp.float32)
        shift = b0

    # ---- channel padding: Cin -> 8-aligned (sublane-aligned im2col stacking),
    # Cout -> 16 only (planar output is lane-dense regardless of Cout)
    cinp = _round_up(Cin, 8)
    coutp = _round_up(Cout, 16)
    kdim = kh * kw * cinp

    # ---- weights: fold scale, pad Cin, reorder (Cout, kh, kw, cinp) -> K-flat
    w_f = jnp.pad(w * scale[:, None, None, None],
                  ((0, 0), (0, cinp - Cin), (0, 0), (0, 0)))
    w_mat = jnp.transpose(w_f, (0, 2, 3, 1)).reshape(Cout, kdim)
    w_mat = jnp.pad(w_mat, ((0, coutp - Cout), (0, 0))).astype(jnp.bfloat16)
    shift_p = jnp.pad(shift, (0, coutp - Cout)).reshape(coutp, 1)

    # ---- input: NCHW -> spatial pad -> channel-planar (cinp, N*Hp*Wp) bf16
    x_pad = jnp.pad(x_nchw.astype(jnp.bfloat16),
                    ((0, 0), (0, cinp - Cin),
                     (padding, padding), (padding, padding)))
    x_planar = jnp.transpose(x_pad, (1, 0, 2, 3)).reshape(cinp, N * Hp * Wp)
    P = N * Hp * Wp

    # ---- taps as lane offsets into the dense (stride-1) padded position grid
    taps = tuple(ti * dilation * Wp + tj * dilation
                 for ti in range(kh) for tj in range(kw))
    d_max = taps[-1]
    halo = _round_up(max(d_max, 1), 128)
    # tile: multiple of the halo, shrunk so nblk >= 2 when possible
    half = _round_up(pl.cdiv(P, 2), halo)
    tm_pos = max(halo, min(_round_up(tm, halo), half))
    nblk = pl.cdiv(P, tm_pos)
    p_alloc = nblk * tm_pos + halo
    x_planar = jnp.pad(x_planar, ((0, 0), (0, p_alloc - P)))

    out = _fused_conv_bn_relu(
        x_planar, w_mat, shift_p, taps=taps, cinp=cinp, tm_pos=tm_pos,
        halo=halo, nblk=nblk, coutp=coutp, apply_relu=relu)

    # ---- crop valid channels/positions, subsample for stride, back to NCHW
    # TODO(synk): keep the planar bf16 layout end-to-end if the consumer
    #             allows; this crop/transpose/f32 cast only exists to match
    #             the PyTorch NCHW float32 output convention.
    y = out[:Cout, :P].reshape(Cout, N, Hp, Wp)
    y = jnp.transpose(y, (1, 0, 2, 3))
    y = y[:, :, ::stride, ::stride][:, :, :Ho, :Wo]
    return y.astype(jnp.float32)


# ----------------------------------------------------------------------------
# Pure-JAX reference (module semantics in f32) for a sanity check
# ----------------------------------------------------------------------------
def _reference(x, params, *, stride, padding, dilation, eps=1e-5):
    y = jax.lax.conv_general_dilated(
        x, params["conv_weight"],
        window_strides=(stride, stride),
        padding=[(padding, padding), (padding, padding)],
        rhs_dilation=(dilation, dilation),
        dimension_numbers=("NCHW", "OIHW", "NCHW"),
    )
    g = params["bn_gamma"][None, :, None, None]
    b = params["bn_beta"][None, :, None, None]
    m = params["bn_running_mean"][None, :, None, None]
    v = params["bn_running_var"][None, :, None, None]
    y = (y - m) / jnp.sqrt(v + eps) * g + b
    return jnp.maximum(y, 0.0)


if __name__ == "__main__":
    # BasicConv(in_planes=4, out_planes=8, kernel_size=3, stride=1, padding=1)
    N, Cin, H, W = 2, 4, 16, 16
    Cout, K = 8, 3
    stride, padding, dilation = 1, 1, 1

    key = jax.random.PRNGKey(0)
    kx, kw, kg, kb, km, kv = jax.random.split(key, 6)

    x = jax.random.normal(kx, (N, Cin, H, W), jnp.float32)
    params = {
        "conv_weight": jax.random.normal(kw, (Cout, Cin, K, K), jnp.float32) * 0.1,
        "bn_gamma": jax.random.normal(kg, (Cout,), jnp.float32) * 0.1 + 1.0,
        "bn_beta": jax.random.normal(kb, (Cout,), jnp.float32) * 0.1,
        "bn_running_mean": jax.random.normal(km, (Cout,), jnp.float32) * 0.1,
        "bn_running_var": jax.nn.softplus(
            jax.random.normal(kv, (Cout,), jnp.float32)) + 0.5,
    }

    fwd = jax.jit(functools.partial(
        basic_conv_forward, stride=stride, padding=padding, dilation=dilation))
    out = fwd(x, params)
    out = jax.block_until_ready(out)

    ref = _reference(x, params, stride=stride, padding=padding,
                     dilation=dilation)
    assert out.shape == (N, Cout, H, W), out.shape
    # bf16 operands / bf16 store with f32 accumulation -> relaxed tolerance
    assert jnp.allclose(out, ref, atol=5e-2, rtol=5e-2), \
        float(jnp.max(jnp.abs(out - ref)))

    print("KERNEL_OK")
</pallas_src>

<mosaic_0001>
module attributes {stable_mosaic.version = 11 : i64} {
  func.func @kernel(%arg0: i32, %arg1: memref<8x384xbf16, #tpu.memory_space<vmem>>, %arg2: memref<8x128xbf16, #tpu.memory_space<vmem>>, %arg3: memref<16x72xbf16, #tpu.memory_space<vmem>>, %arg4: memref<16x1xf32, #tpu.memory_space<vmem>>, %arg5: memref<16x384xbf16, #tpu.memory_space<vmem>>) attributes {dimension_semantics = [#tpu.dimension_semantics<parallel>], iteration_bounds = array<i64: 2>, scalar_prefetch = 0 : i64, scratch_operands = 0 : i64, tpu.core_type = #tpu.core_type<tc>, window_params = [{transform_indices = @transform_0, window_bounds = array<i64: 8, 384>}, {transform_indices = @transform_1, window_bounds = array<i64: 8, 128>}, {pipeline_mode = #tpu.pipeline_mode<synchronous>, transform_indices = @transform_2, window_bounds = array<i64: 16, 72>}, {pipeline_mode = #tpu.pipeline_mode<synchronous>, transform_indices = @transform_3, window_bounds = array<i64: 16, 1>}, {transform_indices = @transform_4, window_bounds = array<i64: 16, 384>}]} {
    %c0 = arith.constant 0 : index
    %c0_0 = arith.constant 0 : index
    %0 = vector.load %arg1[%c0, %c0_0] : memref<8x384xbf16, #tpu.memory_space<vmem>>, vector<8x384xbf16>
    %c0_1 = arith.constant 0 : index
    %c0_2 = arith.constant 0 : index
    %1 = vector.load %arg2[%c0_1, %c0_2] : memref<8x128xbf16, #tpu.memory_space<vmem>>, vector<8x128xbf16>
    %2 = tpu.concatenate %0, %1 in 1 : vector<8x384xbf16>, vector<8x128xbf16> -> vector<8x512xbf16>
    %3 = vector.extract_strided_slice %2 {offsets = [0, 0], sizes = [8, 384], strides = [1, 1]} : vector<8x512xbf16> to vector<8x384xbf16>
    %4 = vector.extract_strided_slice %2 {offsets = [0, 1], sizes = [8, 384], strides = [1, 1]} : vector<8x512xbf16> to vector<8x384xbf16>
    %5 = vector.extract_strided_slice %2 {offsets = [0, 2], sizes = [8, 384], strides = [1, 1]} : vector<8x512xbf16> to vector<8x384xbf16>
    %6 = vector.extract_strided_slice %2 {offsets = [0, 18], sizes = [8, 384], strides = [1, 1]} : vector<8x512xbf16> to vector<8x384xbf16>
    %7 = vector.extract_strided_slice %2 {offsets = [0, 19], sizes = [8, 384], strides = [1, 1]} : vector<8x512xbf16> to vector<8x384xbf16>
    %8 = vector.extract_strided_slice %2 {offsets = [0, 20], sizes = [8, 384], strides = [1, 1]} : vector<8x512xbf16> to vector<8x384xbf16>
    %9 = vector.extract_strided_slice %2 {offsets = [0, 36], sizes = [8, 384], strides = [1, 1]} : vector<8x512xbf16> to vector<8x384xbf16>
    %10 = vector.extract_strided_slice %2 {offsets = [0, 37], sizes = [8, 384], strides = [1, 1]} : vector<8x512xbf16> to vector<8x384xbf16>
    %11 = vector.extract_strided_slice %2 {offsets = [0, 38], sizes = [8, 384], strides = [1, 1]} : vector<8x512xbf16> to vector<8x384xbf16>
    %12 = tpu.concatenate %3, %4, %5, %6, %7, %8, %9, %10, %11 in 0 : vector<8x384xbf16>, vector<8x384xbf16>, vector<8x384xbf16>, vector<8x384xbf16>, vector<8x384xbf16>, vector<8x384xbf16>, vector<8x384xbf16>, vector<8x384xbf16>, vector<8x384xbf16> -> vector<72x384xbf16>
    %c0_3 = arith.constant 0 : index
    %c0_4 = arith.constant 0 : index
    %13 = vector.load %arg3[%c0_3, %c0_4] : memref<16x72xbf16, #tpu.memory_space<vmem>>, vector<16x72xbf16>
    %cst = arith.constant dense<0.000000e+00> : vector<16x384xf32>
    %14 = tpu.matmul %13, %12, %cst {dimension_numbers = #tpu.dot_dimension_numbers<[1], [0], [0], [1], [0, 0, 1, 1], [], []>} : vector<16x72xbf16>, vector<72x384xbf16>, vector<16x384xf32> -> vector<16x384xf32>
    %c0_5 = arith.constant 0 : index
    %c0_6 = arith.constant 0 : index
    %15 = vector.load %arg4[%c0_5, %c0_6] : memref<16x1xf32, #tpu.memory_space<vmem>>, vector<16x1xf32>
    %16 = vector.broadcast %15 : vector<16x1xf32> to vector<16x384xf32>
    %17 = arith.addf %14, %16 : vector<16x384xf32>
    %cst_7 = arith.constant 0.000000e+00 : f32
    %18 = vector.broadcast %cst_7 : f32 to vector<16x384xf32>
    %19 = arith.maximumf %17, %18 : vector<16x384xf32>
    %20 = arith.truncf %19 : vector<16x384xf32> to vector<16x384xbf16>
    %c0_8 = arith.constant 0 : index
    %c0_9 = arith.constant 0 : index
    %21 = vector.load %arg5[%c0_8, %c0_9] : memref<16x384xbf16, #tpu.memory_space<vmem>>, vector<16x384xbf16>
    tpu.vector_store %arg5[%c0_8, %c0_9], %20 {strides = array<i32>} : memref<16x384xbf16, #tpu.memory_space<vmem>>, vector<16x384xbf16>,
    return
  }
  func.func @transform_0(%arg0: i32) -> (i32, i32) {
    %c0_i32 = arith.constant 0 : i32
    %c0_i32_0 = arith.constant 0 : i32
    return %c0_i32, %arg0 : i32, i32
  }
  func.func @transform_1(%arg0: i32) -> (i32, i32) {
    %c1_i32 = arith.constant 1 : i32
    %0 = arith.addi %arg0, %c1_i32 : i32
    %c3_i32 = arith.constant 3 : i32
    %1 = arith.muli %0, %c3_i32 : i32
    %c0_i32 = arith.constant 0 : i32
    %c0_i32_0 = arith.constant 0 : i32
    return %c0_i32, %1 : i32, i32
  }
  func.func @transform_2(%arg0: i32) -> (i32, i32) {
    %c0_i32 = arith.constant 0 : i32
    %c0_i32_0 = arith.constant 0 : i32
    %c0_i32_1 = arith.constant 0 : i32
    return %c0_i32, %c0_i32_0 : i32, i32
  }
  func.func @transform_3(%arg0: i32) -> (i32, i32) {
    %c0_i32 = arith.constant 0 : i32
    %c0_i32_0 = arith.constant 0 : i32
    %c0_i32_1 = arith.constant 0 : i32
    return %c0_i32, %c0_i32_0 : i32, i32
  }
  func.func @transform_4(%arg0: i32) -> (i32, i32) {
    %c0_i32 = arith.constant 0 : i32
    %c0_i32_0 = arith.constant 0 : i32
    return %c0_i32, %arg0 : i32, i32
  }
}

</mosaic_0001>

<llo_original>
// kernel: basic_conv_forward.1
$region0: #{basic_conv_forward.1}
  #allocation0 [shape = 'u32[]', space=smem, size = 0x4, offset = 0x4, fixed_abs, tag = 'smem constant byte address 0x4 - core index']
  #allocation1 [shape = 'u32[144,128]{1,0:T(1,128)}', space=vmem, size = 0x12000, scoped, tag = 'internal scratch']
  %s0 = inlined_call_operand.vmem [shape: bf16[8,896], index: 0, kind: input, shape index: {}, may-alias: {0,1}]
  %s1 = inlined_call_operand.vmem [shape: bf16[8,896], index: 1, kind: input, shape index: {}, may-alias: {0,1}]
  %s2 = inlined_call_operand.vmem [shape: bf16[16,72], index: 2, kind: input, shape index: {}]
  %s3 = inlined_call_operand.vmem [shape: f32[16,1], index: 3, kind: input, shape index: {}]
  %s4 = inlined_call_operand.vmem [shape: bf16[16,768], index: 4, kind: output, shape index: {}]
  %s5 = sld [smem:[#allocation0]]
  $region71: #{basic_conv_forward.1} parent=0
    _
  %s7 = ssub.s32 1, %s5
  %s8 = scalar_select 0, %s7, %s5
  $region1: #{basic_conv_forward.1} parent=0
    #allocation2 [shape = 'u8[24576]{0}', space=vmem, size = 0x6000, scoped, tag = 'output window, operand 0']
    loop: start=0, step=1, limit=4
    $region2: #{basic_conv_forward.1} parent=1 // loop_pre_header
      _
    $region3: #{basic_conv_forward.1} parent=1 // loop_header
      %s10 = sphi 0, %s14
      %p11 = scmp.ge.s32.totalorder %s10, 4
      %s20 = sphi 0, %s22
      %s23 = sphi 0, %s20
      %s24 = sphi 0, %s23
      %s40 = sphi 0, %s24
      %s50 = sphi 0, %s52
      %s53 = sphi 0, %s50
      %s54 = sphi 0, %s53
      %s70 = sphi 0, %s54
      %s74 = sphi 0, %s74
      %s76 = sphi 0, %s74
      %s77 = sphi 0, %s76
      %s91 = sphi 0, %s77
      %s95 = sphi 0, %s95
      %s97 = sphi 0, %s95
      %s98 = sphi 0, %s97
      %s112 = sphi 0, %s98
      %s118 = sphi 0, %s120
      %s121 = sphi 0, %s118
      %s122 = sphi 0, %s121
      %s138 = sphi 0, %s122
    $region4: #{basic_conv_forward.1} parent=1 // loop_header_branch
      %13 = sbr.rel (%p11) target = $region8
    $region5: #{basic_conv_forward.1} parent=1 // loop_body
      %s15 = ssub.s32 %s10, 1
      %s16 = ssub.s32 %s10, 2
      %s17 = sadd.s32 %s10, 1
      %s18 = ssub.s32 %s10, %s17
      %p19 = scmp.eq.s32.totalorder %s18, 0
      %s21 = sadd.s32 %s20, 1
      %s22 = scalar_select %p19, %s20, %s21
      %p25 = pneg %p19
      %p26 = scmp.eq.s32.totalorder %s10, 1
      %p27 = por %p25, %p26
      %p28 = scmp.ne.s32.totalorder %s20, %s23
      %p29 = scmp.eq.s32.totalorder %s10, 0
      %p30 = por %p28, %p29
      %p31 = scmp.ne.s32.totalorder %s20, %s23
      %p32 = scmp.eq.s32.totalorder %s15, 1
      %p33 = por %p31, %p32
      %p34 = scmp.ne.s32.totalorder %s23, %s24
      %p35 = scmp.eq.s32.totalorder %s15, 0
      %p36 = por %p34, %p35
      %p37 = scmp.ne.s32.totalorder %s23, %s24
      %p38 = scmp.eq.s32.totalorder %s16, 1
      %p39 = por %p37, %p38
      %p41 = scmp.ne.s32.totalorder %s24, %s40
      %p42 = scmp.eq.s32.totalorder %s16, 0
      %p43 = por %p41, %p42
      %s44 = sadd.s32 %s10, 1
      %s45 = smul.u32 %s44, 3
      %s46 = sadd.s32 %s17, 1
      %s47 = smul.u32 %s46, 3
      %s48 = ssub.s32 %s45, %s47
      %p49 = scmp.eq.s32.totalorder %s48, 0
      %s51 = sadd.s32 %s50, 1
      %s52 = scalar_select %p49, %s50, %s51
      %p55 = pneg %p49
      %p56 = scmp.eq.s32.totalorder %s10, 1
      %p57 = por %p55, %p56
      %p58 = scmp.ne.s32.totalorder %s50, %s53
      %p59 = scmp.eq.s32.totalorder %s10, 0
      %p60 = por %p58, %p59
      %p61 = scmp.ne.s32.totalorder %s50, %s53
      %p62 = scmp.eq.s32.totalorder %s15, 1
      %p63 = por %p61, %p62
      %p64 = scmp.ne.s32.totalorder %s53, %s54
      %p65 = scmp.eq.s32.totalorder %s15, 0
      %p66 = por %p64, %p65
      %p67 = scmp.ne.s32.totalorder %s53, %s54
      %p68 = scmp.eq.s32.totalorder %s16, 1
      %p69 = por %p67, %p68
      %p71 = scmp.ne.s32.totalorder %s54, %s70
      %p72 = scmp.eq.s32.totalorder %s16, 0
      %p73 = por %p71, %p72
      %s75 = sadd.s32 %s74, 1
      %p78 = scmp.eq.s32.totalorder %s10, 1
      %p79 = scmp.ne.s32.totalorder %s74, %s76
      %p80 = scmp.eq.s32.totalorder %s10, 0
      %p81 = por %p79, %p80
      %p82 = scmp.ne.s32.totalorder %s74, %s76
      %p83 = scmp.eq.s32.totalorder %s15, 1
      %p84 = por %p82, %p83
      %p85 = scmp.ne.s32.totalorder %s76, %s77
      %p86 = scmp.eq.s32.totalorder %s15, 0
      %p87 = por %p85, %p86
      %p88 = scmp.ne.s32.totalorder %s76, %s77
      %p89 = scmp.eq.s32.totalorder %s16, 1
      %p90 = por %p88, %p89
      %p92 = scmp.ne.s32.totalorder %s77, %s91
      %p93 = scmp.eq.s32.totalorder %s16, 0
      %p94 = por %p92, %p93
      %s96 = sadd.s32 %s95, 1
      %p99 = scmp.eq.s32.totalorder %s10, 1
      %p100 = scmp.ne.s32.totalorder %s95, %s97
      %p101 = scmp.eq.s32.totalorder %s10, 0
      %p102 = por %p100, %p101
      %p103 = scmp.ne.s32.totalorder %s95, %s97
      %p104 = scmp.eq.s32.totalorder %s15, 1
      %p105 = por %p103, %p104
      %p106 = scmp.ne.s32.totalorder %s97, %s98
      %p107 = scmp.eq.s32.totalorder %s15, 0
      %p108 = por %p106, %p107
      %p109 = scmp.ne.s32.totalorder %s97, %s98
      %p110 = scmp.eq.s32.totalorder %s16, 1
      %p111 = por %p109, %p110
      %p113 = scmp.ne.s32.totalorder %s98, %s112
      %p114 = scmp.eq.s32.totalorder %s16, 0
      %p115 = por %p113, %p114
      %s116 = ssub.s32 %s10, %s17
      %p117 = scmp.eq.s32.totalorder %s116, 0
      %s119 = sadd.s32 %s118, 1
      %s120 = scalar_select %p117, %s118, %s119
      %p123 = pneg %p117
      %p124 = scmp.eq.s32.totalorder %s10, 1
      %p125 = por %p123, %p124
      %p126 = scmp.ne.s32.totalorder %s118, %s121
      %p127 = scmp.eq.s32.totalorder %s10, 0
      %p128 = por %p126, %p127
      %p129 = scmp.ne.s32.totalorder %s118, %s121
      %p130 = scmp.eq.s32.totalorder %s15, 1
      %p131 = por %p129, %p130
      %p132 = scmp.ne.s32.totalorder %s121, %s122
      %p133 = scmp.eq.s32.totalorder %s15, 0
      %p134 = por %p132, %p133
      %p135 = scmp.ne.s32.totalorder %s121, %s122
      %p136 = scmp.eq.s32.totalorder %s16, 1
      %p137 = por %p135, %p136
      %p139 = scmp.ne.s32.totalorder %s122, %s138
      %p140 = scmp.eq.s32.totalorder %s16, 0
      %p141 = por %p139, %p140
      %p142 = scmp.le.s32.totalorder 1, %s10
      %p143 = scmp.lt.s32.totalorder %s10, 3
      %p144 = pnand %p142, %p143
      %p145 = pneg %p144
      // Predicated region
      $region9: #{basic_conv_forward.1} parent=5 // pred_check
        _
      $region10: #{basic_conv_forward.1} parent=5 // pred_check_branch
        %147 = sbr.rel (%p144) target = $region12
      $region11: #{basic_conv_forward.1} parent=5 // pred_region
        %s148 = ssub.s32 %s10, 1
        // Predicated region
        $region13: #{basic_conv_forward.1} parent=11 // pred_check
          %p149 = pneg %p87
        $region14: #{basic_conv_forward.1} parent=11 // pred_check_branch
          %151 = sbr.rel (%p149) target = $region16
        $region15: #{basic_conv_forward.1} parent=11 // pred_region
          _
        $region16: #{basic_conv_forward.1} parent=11 // pred_fallthru
          _
        // Predicated region
        $region17: #{basic_conv_forward.1} parent=11 // pred_check
          %p152 = pneg %p108
        $region18: #{basic_conv_forward.1} parent=11 // pred_check_branch
          %154 = sbr.rel (%p152) target = $region20
        $region19: #{basic_conv_forward.1} parent=11 // pred_region
          _
        $region20: #{basic_conv_forward.1} parent=11 // pred_fallthru
          _
      $region12: #{basic_conv_forward.1} parent=5 // pred_fallthru
        _
      %p155 = scmp.lt.s32.totalorder %s10, 2
      // Predicated region
      $region21: #{basic_conv_forward.1} parent=5 // pred_check
        %p156 = pneg %p155
      $region22: #{basic_conv_forward.1} parent=5 // pred_check_branch
        %158 = sbr.rel (%p156) target = $region24
      $region23: #{basic_conv_forward.1} parent=5 // pred_region
        // Predicated region
        $region25: #{basic_conv_forward.1} parent=23 // pred_check
          %p159 = pneg %p30
        $region26: #{basic_conv_forward.1} parent=23 // pred_check_branch
          %161 = sbr.rel (%p159) target = $region28
        $region27: #{basic_conv_forward.1} parent=23 // pred_region
          %s162 = smul.u32 3, %s10
          %s163 = ssub.s32 7, %s162
          %p164 = scmp.lt.s32.totalorder %s163, 3
          %s165 = scalar_select %p164, %s163, 3
          %s166 = smul.u32 64, %s165
          %p167 = scmp.lt.s32.totalorder %s162, 6
          %s168 = scalar_select %p167, %s162, 6
          %s169 = smul.addr %s168, 4
          %s170 = scalar_lea.vmem %s0, %s169
          %s171 = smul.u32 3, %s10
          %s172 = ssub.s32 7, %s171
          %p173 = scmp.lt.s32.totalorder %s172, 3
          %s174 = scalar_select %p173, %s172, 3
          %s175 = smul.u32 64, %s174
        $region28: #{basic_conv_forward.1} parent=23 // pred_fallthru
          _
        // Predicated region
        $region29: #{basic_conv_forward.1} parent=23 // pred_check
          %p176 = pneg %p60
        $region30: #{basic_conv_forward.1} parent=23 // pred_check_branch
          %178 = sbr.rel (%p176) target = $region32
        $region31: #{basic_conv_forward.1} parent=23 // pred_region
          %s179 = sadd.s32 %s10, 1
          %s180 = smul.u32 %s179, 3
          %p181 = scmp.lt.s32.totalorder %s180, 6
          %s182 = scalar_select %p181, %s180, 6
          %s183 = smul.addr %s182, 4
          %s184 = scalar_lea.vmem %s1, %s183
          %s185 = sadd.s32 %s10, 1
          %s186 = smul.u32 %s185, 3
        $region32: #{basic_conv_forward.1} parent=23 // pred_fallthru
          _
      $region24: #{basic_conv_forward.1} parent=5 // pred_fallthru
        _
      %p187 = scmp.le.s32.totalorder 1, %s10
      %p188 = scmp.lt.s32.totalorder %s10, 3
      %p189 = pnand %p187, %p188
      %p190 = pneg %p189
      // Predicated region
      $region33: #{basic_conv_forward.1} parent=5 // pred_check
        _
      $region34: #{basic_conv_forward.1} parent=5 // pred_check_branch
        %192 = sbr.rel (%p189) target = $region36
      $region35: #{basic_conv_forward.1} parent=5 // pred_region
        %s193 = ssub.s32 %s10, 1
        %s194 = smul.u32 3, %s15
        %s195 = ssub.s32 7, %s194
        %p196 = scmp.lt.s32.totalorder %s195, 3
        %s197 = scalar_select %p196, %s195, 3
        %s198 = smul.u32 64, %s197
        %p199 = scmp.lt.s32.totalorder %s194, 6
        %s200 = scalar_select %p199, %s194, 6
        %s201 = smul.addr %s200, 4
        %s202 = scalar_lea.vmem %s0, %s201
        %p203 = pneg %p36
        %p204 = pneg %p33
        %s205 = sadd.s32 %s15, 1
        %s206 = smul.u32 %s205, 3
        %p207 = scmp.lt.s32.totalorder %s206, 6
        %s208 = scalar_select %p207, %s206, 6
        %s209 = smul.addr %s208, 4
        %s210 = scalar_lea.vmem %s1, %s209
        %p211 = pneg %p66
        %p212 = pneg %p63
        %p213 = pneg %p87
        %p214 = pneg %p84
        %p215 = pneg %p108
        %p216 = pneg %p105
        %p217 = pneg %p134
        %p218 = pneg %p131
        %s219 = sand.u32 %s121, 1
        %s220 = sand.u32 %s121, 1
        %s221 = smul.addr %s220, 24
        %s222 = scalar_lea.vmem [#allocation2], %s221
        %s223 = smul.u32 3, %s15
        %s224 = ssub.s32 7, %s223
        %p225 = scmp.lt.s32.totalorder %s224, 3
        %s226 = scalar_select %p225, %s224, 3
        %s227 = smul.u32 64, %s226
        %p228 = scmp.lt.s32.totalorder %s223, 6
        %s229 = scalar_select %p228, %s223, 6
        %s230 = smul.addr %s229, 4
        %s231 = scalar_lea.vmem %s0, %s230
        %s232 = smul.u32 3, %s15
        %s233 = ssub.s32 7, %s232
        %p234 = scmp.lt.s32.totalorder %s233, 3
        %s235 = scalar_select %p234, %s233, 3
        %s236 = smul.u32 64, %s235
        %s237 = sadd.s32 %s15, 1
        %s238 = smul.u32 %s237, 3
        %p239 = scmp.lt.s32.totalorder %s238, 6
        %s240 = scalar_select %p239, %s238, 6
        %s241 = smul.addr %s240, 4
        %s242 = scalar_lea.vmem %s1, %s241
        %s243 = sadd.s32 %s15, 1
        %s244 = smul.u32 %s243, 3
        %s245 = smul.u32 3, %s15
        %v247 = vld [vmem:[%s231] sm:$0xff]
        %v248 = vld [vmem:[%s231 + $0x8] sm:$0xf]
        %v249 = vld [vmem:[%s242] sm:$0xf]
        %v252 = vunpack.c.l.b16 %v247
        %v253 = vunpack.c.h.b16 %v247
        %v254 = vunpack.c.l.b16 %v248
        %v255 = vpack.c.b16 %v252, %v252
        %v256 = vpack.c.b16 %v253, %v253
        %v257 = vpack.c.b16 %v254, %v254
        %v259 = vrot.slane %v255, 4
        %v260 = vrot.slane %v256, 4
        %v261 = vrot.slane %v257, 4
        %v262 = vrot.slane %v249, 4
        %263 = vrot.lane.b32.xlu0 %v259, 127
        %v264 = vpop.permute.xlu0 %263
        %265 = vrot.lane.b32.xlu0 %v260, 127
        %v266 = vpop.permute.xlu0 %265
        %267 = vrot.lane.b32.xlu0 %v261, 127
        %v268 = vpop.permute.xlu0 %267
        %269 = vrot.lane.b32.xlu0 %v262, 127
        %v270 = vpop.permute.xlu0 %269
        %vm271 = vcmask 1039360
        %v272 = vsel %vm271, %v264, %v266
        %v273 = vsel %vm271, %v266, %v268
        %v274 = vsel %vm271, %v268, %v270
        %275 = vrot.lane.b32.xlu0 %v255, 126
        %v276 = vpop.permute.xlu0 %275
        %277 = vrot.lane.b32.xlu0 %v256, 126
        %v278 = vpop.permute.xlu0 %277
        %279 = vrot.lane.b32.xlu0 %v257, 126
        %v280 = vpop.permute.xlu0 %279
        %281 = vrot.lane.b32.xlu0 %v249, 126
        %v282 = vpop.permute.xlu0 %281
        %vm283 = vcmask 1031168
        %v284 = vsel %vm283, %v276, %v278
        %v285 = vsel %vm283, %v278, %v280
        %v286 = vsel %vm283, %v280, %v282
        %287 = vrot.lane.b32.xlu0 %v259, 110
        %v288 = vpop.permute.xlu0 %287
        %289 = vrot.lane.b32.xlu0 %v260, 110
        %v290 = vpop.permute.xlu0 %289
        %291 = vrot.lane.b32.xlu0 %v261, 110
        %v292 = vpop.permute.xlu0 %291
        %293 = vrot.lane.b32.xlu0 %v262, 110
        %v294 = vpop.permute.xlu0 %293
        %vm295 = vcmask 900096
        %v296 = vsel %vm295, %v288, %v290
        %v297 = vsel %vm295, %v290, %v292
        %v298 = vsel %vm295, %v292, %v294
        %299 = vrot.lane.b32.xlu0 %v255, 109
        %v300 = vpop.permute.xlu0 %299
        %301 = vrot.lane.b32.xlu0 %v256, 109
        %v302 = vpop.permute.xlu0 %301
        %303 = vrot.lane.b32.xlu0 %v257, 109
        %v304 = vpop.permute.xlu0 %303
        %305 = vrot.lane.b32.xlu0 %v249, 109
        %v306 = vpop.permute.xlu0 %305
        %vm307 = vcmask 891904
        %v308 = vsel %vm307, %v300, %v302
        %v309 = vsel %vm307, %v302, %v304
        %v310 = vsel %vm307, %v304, %v306
        %311 = vrot.lane.b32.xlu0 %v259, 108
        %v312 = vpop.permute.xlu0 %311
        %313 = vrot.lane.b32.xlu0 %v260, 108
        %v314 = vpop.permute.xlu0 %313
        %315 = vrot.lane.b32.xlu0 %v261, 108
        %v316 = vpop.permute.xlu0 %315
        %317 = vrot.lane.b32.xlu0 %v262, 108
        %v318 = vpop.permute.xlu0 %317
        %vm319 = vcmask 883712
        %v320 = vsel %vm319, %v312, %v314
        %v321 = vsel %vm319, %v314, %v316
        %v322 = vsel %vm319, %v316, %v318
        %323 = vrot.lane.b32.xlu0 %v255, 92
        %v324 = vpop.permute.xlu0 %323
        %325 = vrot.lane.b32.xlu0 %v256, 92
        %v326 = vpop.permute.xlu0 %325
        %327 = vrot.lane.b32.xlu0 %v257, 92
        %v328 = vpop.permute.xlu0 %327
        %329 = vrot.lane.b32.xlu0 %v249, 92
        %v330 = vpop.permute.xlu0 %329
        %vm331 = vcmask 752640
        %v332 = vsel %vm331, %v324, %v326
        %v333 = vsel %vm331, %v326, %v328
        %v334 = vsel %vm331, %v328, %v330
        %335 = vrot.lane.b32.xlu0 %v259, 91
        %v336 = vpop.permute.xlu0 %335
        %337 = vrot.lane.b32.xlu0 %v260, 91
        %v338 = vpop.permute.xlu0 %337
        %339 = vrot.lane.b32.xlu0 %v261, 91
        %v340 = vpop.permute.xlu0 %339
        %341 = vrot.lane.b32.xlu0 %v262, 91
        %v342 = vpop.permute.xlu0 %341
        %vm343 = vcmask 744448
        %v344 = vsel %vm343, %v336, %v338
        %v345 = vsel %vm343, %v338, %v340
        %v346 = vsel %vm343, %v340, %v342
        %347 = vrot.lane.b32.xlu0 %v255, 90
        %v348 = vpop.permute.xlu0 %347
        %349 = vrot.lane.b32.xlu0 %v256, 90
        %v350 = vpop.permute.xlu0 %349
        %351 = vrot.lane.b32.xlu0 %v257, 90
        %v352 = vpop.permute.xlu0 %351
        %353 = vrot.lane.b32.xlu0 %v249, 90
        %v354 = vpop.permute.xlu0 %353
        %vm355 = vcmask 736256
        %v356 = vsel %vm355, %v348, %v350
        %v357 = vsel %vm355, %v350, %v352
        %v358 = vsel %vm355, %v352, %v354
        %vm359 = vcmask 1043456
        %v362 = vsel %vm359, %v255, %v272
        %v366 = vsel %vm359, %v256, %v273
        %v370 = vsel %vm359, %v257, %v274
        %v374 = vsel %vm359, %v284, %v296
        %v378 = vsel %vm359, %v285, %v297
        %v382 = vsel %vm359, %v286, %v298
        %v386 = vsel %vm359, %v308, %v320
        %v390 = vsel %vm359, %v309, %v321
        %v394 = vsel %vm359, %v310, %v322
        %v398 = vsel %vm359, %v332, %v344
        %v402 = vsel %vm359, %v333, %v345
        %v406 = vsel %vm359, %v334, %v346
        %v408 = vld [vmem:[%s2] sm:$0xf]
        %v409 = vld [vmem:[%s2 + $0x4] sm:$0xf]
        %v410 = vld [vmem:[%s3] sm:$0xff]
        %v411 = vld [vmem:[%s3 + $0x8] sm:$0xff]
        %413 = vset.pattern.permute.xlu0 0
        %414 = vperm.xlu0 %413, %v410
        %v415 = vpop.permute.xlu0 %414
        %418 = vset.pattern.permute.xlu0 0
        %419 = vperm.xlu0 %418, %v411
        %v420 = vpop.permute.xlu0 %419
        %v424 = vunpack.c.l.b16 %v408
        %v425 = vunpack.c.l.b16 %v409
        %v426 = vpack.c.b16 %v425, %v424
        %vm427 = vcmask 588800
        %v429 = vsel %vm427, %v426, 0
        %v432 = vsel %vm359, %v356, 0
        %v435 = vsel %vm359, %v357, 0
        %v438 = vsel %vm359, %v358, 0
        %440 = vmatprep.subr.bf16.mxu0 %v366
        %441 = vmatpush1.bf16.msra.mxu0 %v362
        %442 = vmatprep.subr.bf16.mxu0 %v378
        %443 = vmatpush1.bf16.msra.mxu0 %v374
        %444 = vmatprep.subr.bf16.mxu0 %v390
        %445 = vmatpush1.bf16.msra.mxu0 %v386
        %446 = vmatprep.subr.bf16.mxu0 %v402
        %447 = vmatpush1.bf16.msra.mxu0 %v398
        %448 = vmatprep.subr.bf16.mxu0 %v435
        %449 = vmatpush1.bf16.msra.mxu0 %v432
        %450 = vmatprep.subr.bf16.mxu0 0
        %451 = vmatpush1.bf16.msra.mxu0 0
        %452 = vmatprep.subr.bf16.mxu0 0
        %453 = vmatpush1.bf16.msra.mxu0 0
        %454 = vmatprep.subr.bf16.mxu0 0
        %455 = vmatpush1.bf16.msra.mxu0 0
        %456 = vmatprep.subr.bf16.mxu0 0
        %457 = vmatpush1.bf16.msra.mxu0 0
        %458 = vmatprep.subr.bf16.mxu0 0
        %459 = vmatpush1.bf16.msra.mxu0 0
        %460 = vmatprep.subr.bf16.mxu0 0
        %461 = vmatpush1.bf16.msra.mxu0 0
        %462 = vmatprep.subr.bf16.mxu0 0
        %463 = vmatpush1.bf16.msra.mxu0 0
        %464 = vmatprep.subr.bf16.mxu0 0
        %465 = vmatpush1.bf16.msra.mxu0 0
        %466 = vmatprep.subr.bf16.mxu0 0
        %467 = vmatpush1.bf16.msra.mxu0 0
        %468 = vmatprep.subr.bf16.mxu0 0
        %469 = vmatpush1.bf16.msra.mxu0 0
        %470 = vmatprep.subr.bf16.mxu0 0
        %471 = vmatpush1.bf16.msra.mxu0 0
        %472 = vmatprep.mubr.bf16.mxu0 0
        %473 = vmatmul.mubr.bf16.gmra.mrb[0].mxu0 %v429
        %v474 = vpop.f32.mrb[0].mxu0
        %v475 = vadd.f32 %v415, %v474
        %v476 = vpop.f32.mrb[0].mxu0
        %v477 = vadd.f32 %v415, %v476
        %v478 = vpop.f32.mrb[0].mxu0
        %v479 = vadd.f32 %v420, %v478
        %v480 = vpop.f32.mrb[0].mxu0
        %v481 = vadd.f32 %v420, %v480
        %482 = vdwg.mxu0
        %483 = vmatprep.subr.bf16.mxu0 0
        %484 = vmatpush1.bf16.msra.mxu0 %v370
        %485 = vmatprep.subr.bf16.mxu0 0
        %486 = vmatpush1.bf16.msra.mxu0 %v382
        %487 = vmatprep.subr.bf16.mxu0 0
        %488 = vmatpush1.bf16.msra.mxu0 %v394
        %489 = vmatprep.subr.bf16.mxu0 0
        %490 = vmatpush1.bf16.msra.mxu0 %v406
        %491 = vmatprep.subr.bf16.mxu0 0
        %492 = vmatpush1.bf16.msra.mxu0 %v438
        %493 = vmatprep.subr.bf16.mxu0 0
        %494 = vmatpush1.bf16.msra.mxu0 0
        %495 = vmatprep.subr.bf16.mxu0 0
        %496 = vmatpush1.bf16.msra.mxu0 0
        %497 = vmatprep.subr.bf16.mxu0 0
        %498 = vmatpush1.bf16.msra.mxu0 0
        %499 = vmatprep.subr.bf16.mxu0 0
        %500 = vmatpush1.bf16.msra.mxu0 0
        %501 = vmatprep.subr.bf16.mxu0 0
        %502 = vmatpush1.bf16.msra.mxu0 0
        %503 = vmatprep.subr.bf16.mxu0 0
        %504 = vmatpush1.bf16.msra.mxu0 0
        %505 = vmatprep.subr.bf16.mxu0 0
        %506 = vmatpush1.bf16.msra.mxu0 0
        %507 = vmatprep.subr.bf16.mxu0 0
        %508 = vmatpush1.bf16.msra.mxu0 0
        %509 = vmatprep.subr.bf16.mxu0 0
        %510 = vmatpush1.bf16.msra.mxu0 0
        %511 = vmatprep.subr.bf16.mxu0 0
        %512 = vmatpush1.bf16.msra.mxu0 0
        %513 = vmatprep.subr.bf16.mxu0 0
        %514 = vmatpush1.bf16.msra.mxu0 0
        %515 = vmatprep.mubr.bf16.mxu0 0
        %516 = vmatmul.mubr.bf16.gmra.mrb[0].mxu0 %v429
        %v517 = vpop.f32.mrb[0].mxu0
        %v518 = vadd.f32 %v415, %v517
        %v519 = vpop.f32.mrb[0].mxu0
        %v520 = vpop.f32.mrb[0].mxu0
        %v521 = vadd.f32 %v420, %v520
        %v522 = vpop.f32.mrb[0].mxu0
        %523 = vdwg.mxu0
        %v524 = vmax.f32 %v475, 0.0
        %v525 = vmax.f32 %v477, 0.0
        %v526 = vmax.f32 %v518, 0.0
        %v527 = vmax.f32 %v479, 0.0
        %v528 = vmax.f32 %v481, 0.0
        %v529 = vmax.f32 %v521, 0.0
        %v530 = vpack.c.bf16 %v527, %v524
        %v531 = vpack.c.bf16 %v528, %v525
        %v532 = vpack.c.bf16 %v529, %v526
        %v536 = vunpack.c.l.b16 %v530
        %v537 = vunpack.c.l.b16 %v531
        %v538 = vunpack.c.l.b16 %v532
        %v539 = vunpack.c.h.b16 %v530
        %v540 = vunpack.c.h.b16 %v531
        %v541 = vunpack.c.h.b16 %v532
        %v542 = vpack.c.b16 %v537, %v536
        %v543 = vpack.c.b16 %v538, %v538
        %v544 = vpack.c.b16 %v540, %v539
        %v545 = vpack.c.b16 %v541, %v541
        %550 = vst [vmem:[%s222] sm:$0xff] %v542
        %551 = vst [vmem:[%s222 + $0x8] sm:$0xf] %v543
        %552 = vst [vmem:[%s222 + $0xc] sm:$0xff] %v544
        %553 = vst [vmem:[%s222 + $0x14] sm:$0xf] %v545
        %s554 = sand.u32 %s121, 1
        %s555 = sand.u32 %s121, 1
        %s556 = smul.addr %s555, 24
        %s557 = scalar_lea.vmem [#allocation2], %s556
        // Predicated region
        $region37: #{basic_conv_forward.1} parent=35 // pred_check
          %p558 = pneg %p131
        $region38: #{basic_conv_forward.1} parent=35 // pred_check_branch
          %560 = sbr.rel (%p558) target = $region40
        $region39: #{basic_conv_forward.1} parent=35 // pred_region
          %s561 = smul.u32 3, %s15
          %s562 = smul.addr %s561, 4
          %s563 = scalar_lea.vmem %s4, %s562
          // Predicated region
          $region41: #{basic_conv_forward.1} parent=39 // pred_check
            _
          $region42: #{basic_conv_forward.1} parent=39 // pred_check_branch
            %565 = sbr.rel (0) target = $region44
          $region43: #{basic_conv_forward.1} parent=39 // pred_region
            // Predicated region
            $region45: #{basic_conv_forward.1} parent=43 // pred_check
              _
            $region46: #{basic_conv_forward.1} parent=43 // pred_check_branch
              %567 = sbr.rel (0) target = $region48
            $region47: #{basic_conv_forward.1} parent=43 // pred_region
              %s568 = scalar_lea.vmem %s557, 8 [#allocation2]
              %s569 = scalar_lea.vmem %s563, 8
              loop: start=0, step=1, limit=1
              $region49: #{basic_conv_forward.1} parent=47 // loop_pre_header
                _
              $region50: #{basic_conv_forward.1} parent=47 // loop_header
                %s571 = sphi 0, %s575
                %p572 = scmp.ge.s32.totalorder %s571, 1
                %s576 = sphi %s557, %s557
                %s577 = sphi %s563, %s563
              $region51: #{basic_conv_forward.1} parent=47 // loop_header_branch
                %574 = sbr.rel (%p572) target = $region55
              $region52: #{basic_conv_forward.1} parent=47 // loop_body
                %v578 = vld [vmem:[%s576] sm:$0xff]
                %579 = vst [vmem:[%s577] sm:$0xff] %v578
                %v580 = vld [vmem:[%s576 + $0xc] sm:$0xff]
                %581 = vst [vmem:[%s577 + $0x18] sm:$0xff] %v580
              $region53: #{basic_conv_forward.1} parent=47 // loop_footer
                %s575 = sadd.s32 1, %s571
              $region54: #{basic_conv_forward.1} parent=47 // loop_footer_branch
                %570 = sbr.rel target = $region50
              $region55: #{basic_conv_forward.1} parent=47 // loop_exit
                _
              loop: start=0, step=1, limit=1
              $region56: #{basic_conv_forward.1} parent=47 // loop_pre_header
                _
              $region57: #{basic_conv_forward.1} parent=47 // loop_header
                %s584 = sphi 0, %s588
                %p585 = scmp.ge.s32.totalorder %s584, 1
                %s589 = sphi %s568, %s568
                %s590 = sphi %s569, %s569
              $region58: #{basic_conv_forward.1} parent=47 // loop_header_branch
                %587 = sbr.rel (%p585) target = $region62
              $region59: #{basic_conv_forward.1} parent=47 // loop_body
                %v591 = vld [vmem:[%s589] sm:$0xf]
                %592 = vst [vmem:[%s590] sm:$0xf] %v591
                %v593 = vld [vmem:[%s589 + $0xc] sm:$0xf]
                %594 = vst [vmem:[%s590 + $0x18] sm:$0xf] %v593
              $region60: #{basic_conv_forward.1} parent=47 // loop_footer
                %s588 = sadd.s32 1, %s584
              $region61: #{basic_conv_forward.1} parent=47 // loop_footer_branch
                %583 = sbr.rel target = $region57
              $region62: #{basic_conv_forward.1} parent=47 // loop_exit
                _
            $region48: #{basic_conv_forward.1} parent=43 // pred_fallthru
              _
          $region44: #{basic_conv_forward.1} parent=39 // pred_fallthru
            _
          %595 = vnop
        $region40: #{basic_conv_forward.1} parent=35 // pred_fallthru
          _
      $region36: #{basic_conv_forward.1} parent=5 // pred_fallthru
        _
      %p596 = scmp.le.s32.totalorder 2, %s10
      // Predicated region
      $region63: #{basic_conv_forward.1} parent=5 // pred_check
        %p597 = pneg %p596
      $region64: #{basic_conv_forward.1} parent=5 // pred_check_branch
        %599 = sbr.rel (%p597) target = $region66
      $region65: #{basic_conv_forward.1} parent=5 // pred_region
        %s600 = ssub.s32 %s10, 2
        // Predicated region
        $region67: #{basic_conv_forward.1} parent=65 // pred_check
          %p601 = pneg %p137
        $region68: #{basic_conv_forward.1} parent=65 // pred_check_branch
          %603 = sbr.rel (%p601) target = $region70
        $region69: #{basic_conv_forward.1} parent=65 // pred_region
          %s604 = sand.u32 %s122, 1
          %s605 = sand.u32 %s122, 1
          %s606 = smul.addr %s605, 24
          %s607 = scalar_lea.vmem [#allocation2], %s606
        $region70: #{basic_conv_forward.1} parent=65 // pred_fallthru
          _
      $region66: #{basic_conv_forward.1} parent=5 // pred_fallthru
        _
    $region6: #{basic_conv_forward.1} parent=1 // loop_footer
      %s14 = sadd.s32 1, %s10
    $region7: #{basic_conv_forward.1} parent=1 // loop_footer_branch
      %9 = sbr.rel target = $region3
    $region8: #{basic_conv_forward.1} parent=1 // loop_exit
      _

</llo_original>
